<compile_context>
chip_gen: v5e
topology: v5e:2x2
jax: 0.10.0
libtpu: 0.0.40
codegen_flags: <defaults>
</compile_context>

<pallas_src>
import functools

import jax
import jax.numpy as jnp
from jax.experimental import pallas as pl
from jax.experimental.pallas import tpu as pltpu


# ----------------------------------------------------------------------------- kernel
def qnetwork_kernel(x_ref, w1_ref, b1_ref, w2_ref, b2_ref, w3_ref, b3_ref, out_ref):
    """Fused forward for one batch tile: relu(relu(x@W1+b1)@W2+b2)@W3+b3.

    Matmuls run on the MXU with f32 accumulation; bias add / ReLU run on the VPU in
    f32.  Activations are cast to the weight dtype (bf16) only as MXU inputs.
    """
    x = x_ref[...].astype(w1_ref.dtype)

    h1 = jnp.dot(x, w1_ref[...], preferred_element_type=jnp.float32) + b1_ref[...]
    h1 = jnp.maximum(h1, 0.0)

    h2 = jnp.dot(h1.astype(w2_ref.dtype), w2_ref[...],
                 preferred_element_type=jnp.float32) + b2_ref[...]
    h2 = jnp.maximum(h2, 0.0)

    q = jnp.dot(h2.astype(w3_ref.dtype), w3_ref[...],
                preferred_element_type=jnp.float32) + b3_ref[...]
    out_ref[...] = q.astype(out_ref.dtype)


# ----------------------------------------------------------------------------- helpers
def _round_up(n, m):
    return ((n + m - 1) // m) * m


def _cdiv(a, b):
    return -(-a // b)


def _batch_tiling(batch, tb_max):
    """Tile the batch into n_tiles sublane-aligned tiles, padding at most 7 tail rows
    beyond what the 8-row sublane alignment requires."""
    n_tiles = max(1, _cdiv(batch, tb_max))
    # Guarantee >= 2 grid steps for non-trivial batches so the "parallel" batch axis
    # actually feeds both TensorCores on v7x (harmless ~0.35us extra step elsewhere).
    if n_tiles == 1 and batch >= 16:
        n_tiles = 2
    tb = _round_up(_cdiv(batch, n_tiles), 8)
    padded_batch = n_tiles * tb
    return n_tiles, tb, padded_batch


# ----------------------------------------------------------------------------- params
def init_qnetwork_params(key, state_dim, action_dim, hidden_dim=64):
    """He (kaiming_normal, fan_in, relu) init for weights, zeros for biases.

    PyTorch nn.Linear stores weight as (out, in); we store the transpose (in, out)
    so the kernel computes x @ W without a transpose.
    """
    k1, k2, k3 = jax.random.split(key, 3)

    def he(k, fan_in, fan_out):
        std = jnp.sqrt(2.0 / fan_in)
        return jax.random.normal(k, (fan_in, fan_out), dtype=jnp.float32) * std

    return {
        "w1": he(k1, state_dim, hidden_dim),
        "b1": jnp.zeros((1, hidden_dim), jnp.float32),
        "w2": he(k2, hidden_dim, hidden_dim),
        "b2": jnp.zeros((1, hidden_dim), jnp.float32),
        "w3": he(k3, hidden_dim, action_dim),
        "b3": jnp.zeros((1, action_dim), jnp.float32),
    }


def prepare_qnetwork_params(params, compute_dtype=jnp.bfloat16):
    """One-time: pad feature dims to lane-dense multiples of 128 and cast weights to
    the MXU compute dtype.  Do this at init / after each optimizer step, NOT per call.
    Zero padding is exact: relu(0)=0 and zero weight rows/cols contribute nothing."""
    state_dim, hidden = params["w1"].shape
    action_dim = params["w3"].shape[1]
    h_pad = _round_up(hidden, 128)
    n_out = _round_up(action_dim, 128)
    cd = compute_dtype

    return {
        "w1": jnp.zeros((state_dim, h_pad), cd).at[:, :hidden].set(params["w1"].astype(cd)),
        "b1": jnp.zeros((1, h_pad), jnp.float32).at[:, :hidden].set(params["b1"]),
        "w2": jnp.zeros((h_pad, h_pad), cd).at[:hidden, :hidden].set(params["w2"].astype(cd)),
        "b2": jnp.zeros((1, h_pad), jnp.float32).at[:, :hidden].set(params["b2"]),
        "w3": jnp.zeros((h_pad, n_out), cd).at[:hidden, :action_dim].set(params["w3"].astype(cd)),
        "b3": jnp.zeros((1, n_out), jnp.float32).at[:, :action_dim].set(params["b3"]),
    }


# ----------------------------------------------------------------------------- forward
@functools.partial(jax.jit, static_argnames=("action_dim", "tb_max"))
def qnetwork_forward(x, prepped, action_dim, *, tb_max=512):
    """Q-network forward via the fused Pallas kernel.

    x:       (batch, state_dim) float32 (cast to bf16 inside the kernel)
    prepped: output of prepare_qnetwork_params (padded, bf16 weights / f32 biases)
    returns: (batch, action_dim) float32 Q-values
    """
    batch, state_dim = x.shape
    h_pad = prepped["w1"].shape[1]
    n_out = prepped["w3"].shape[1]

    n_tiles, tb, padded_batch = _batch_tiling(batch, tb_max)

    # Tail-only padding of x; pass-through (no copy) when already aligned.
    xp = x if padded_batch == batch else jnp.pad(x, ((0, padded_batch - batch), (0, 0)))

    # Weights / biases: same block every grid step -> DMA'd once, VMEM-resident.
    resident = lambda shape: pl.BlockSpec(shape, lambda i: (0, 0))

    x_bytes = padded_batch * state_dim * jnp.dtype(x.dtype).itemsize
    param_bytes = sum(int(v.size) * jnp.dtype(v.dtype).itemsize for v in prepped.values())
    out_bytes = padded_batch * n_out * 4
    flops = 2 * padded_batch * (state_dim * h_pad + h_pad * h_pad + h_pad * n_out)

    out = pl.pallas_call(
        qnetwork_kernel,
        out_shape=jax.ShapeDtypeStruct((padded_batch, n_out), jnp.float32),
        grid=(n_tiles,),
        in_specs=[
            pl.BlockSpec((tb, state_dim), lambda i: (i, 0)),  # x: tiled over batch
            resident((state_dim, h_pad)),                     # w1
            resident((1, h_pad)),                             # b1
            resident((h_pad, h_pad)),                         # w2
            resident((1, h_pad)),                             # b2
            resident((h_pad, n_out)),                         # w3
            resident((1, n_out)),                             # b3
        ],
        out_specs=pl.BlockSpec((tb, n_out), lambda i: (i, 0)),
        compiler_params=pltpu.CompilerParams(
            dimension_semantics=("parallel",),  # batch tiles shard across TCs on v7x
        ),
        cost_estimate=pl.CostEstimate(
            flops=flops, transcendentals=0,
            bytes_accessed=x_bytes + param_bytes + out_bytes),
    )(xp, prepped["w1"], prepped["b1"], prepped["w2"], prepped["b2"],
      prepped["w3"], prepped["b3"])

    return out[:batch, :action_dim]


# ----------------------------------------------------------------------------- reference
def qnetwork_reference(x, params, compute_dtype=jnp.bfloat16):
    """Pure-JAX reference mirroring the kernel's dtype policy (bf16 MXU, f32 accum)."""
    cd = compute_dtype
    h1 = jnp.dot(x.astype(cd), params["w1"].astype(cd),
                 preferred_element_type=jnp.float32) + params["b1"]
    h1 = jnp.maximum(h1, 0.0)
    h2 = jnp.dot(h1.astype(cd), params["w2"].astype(cd),
                 preferred_element_type=jnp.float32) + params["b2"]
    h2 = jnp.maximum(h2, 0.0)
    return jnp.dot(h2.astype(cd), params["w3"].astype(cd),
                   preferred_element_type=jnp.float32) + params["b3"]


# ----------------------------------------------------------------------------- main
if __name__ == "__main__":
    state_dim, action_dim, hidden_dim = 8, 4, 64

    key = jax.random.PRNGKey(0)
    k_params, k_x1, k_x2 = jax.random.split(key, 3)

    params = init_qnetwork_params(k_params, state_dim, action_dim, hidden_dim)
    prepped = prepare_qnetwork_params(params)          # one-time, out of the hot loop
    prepped = jax.block_until_ready(prepped)

    # Small single-tile case (batch=2 -> one 8-row tile).
    x1 = jax.random.normal(k_x1, (2, state_dim), dtype=jnp.float32)
    q1 = jax.block_until_ready(qnetwork_forward(x1, prepped, action_dim))
    assert q1.shape == (2, action_dim)
    assert jnp.allclose(q1, qnetwork_reference(x1, params), atol=1e-2, rtol=1e-2), \
        "mismatch vs reference (batch=2)"

    # Multi-tile case exercising the >=2 parallel tiles + tail-padding path.
    x2 = jax.random.normal(k_x2, (40, state_dim), dtype=jnp.float32)
    q2 = jax.block_until_ready(qnetwork_forward(x2, prepped, action_dim))
    assert q2.shape == (40, action_dim)
    assert jnp.allclose(q2, qnetwork_reference(x2, params), atol=1e-2, rtol=1e-2), \
        "mismatch vs reference (batch=40)"

    print("KERNEL_OK")
</pallas_src>

<mosaic_0001>
module attributes {stable_mosaic.version = 11 : i64} {
  func.func @qnetwork_kernel(%arg0: i32, %arg1: memref<8x8xf32, #tpu.memory_space<vmem>>, %arg2: memref<8x128xbf16, #tpu.memory_space<vmem>>, %arg3: memref<1x128xf32, #tpu.memory_space<vmem>>, %arg4: memref<128x128xbf16, #tpu.memory_space<vmem>>, %arg5: memref<1x128xf32, #tpu.memory_space<vmem>>, %arg6: memref<128x128xbf16, #tpu.memory_space<vmem>>, %arg7: memref<1x128xf32, #tpu.memory_space<vmem>>, %arg8: memref<8x128xf32, #tpu.memory_space<vmem>>) attributes {dimension_semantics = [#tpu.dimension_semantics<parallel>], iteration_bounds = array<i64: 1>, scalar_prefetch = 0 : i64, scratch_operands = 0 : i64, tpu.core_type = #tpu.core_type<tc>, window_params = [{transform_indices = @transform_0, window_bounds = array<i64: 8, 8>}, {pipeline_mode = #tpu.pipeline_mode<synchronous>, transform_indices = @transform_1, window_bounds = array<i64: 8, 128>}, {pipeline_mode = #tpu.pipeline_mode<synchronous>, transform_indices = @transform_2, window_bounds = array<i64: 1, 128>}, {pipeline_mode = #tpu.pipeline_mode<synchronous>, transform_indices = @transform_3, window_bounds = array<i64: 128, 128>}, {pipeline_mode = #tpu.pipeline_mode<synchronous>, transform_indices = @transform_4, window_bounds = array<i64: 1, 128>}, {pipeline_mode = #tpu.pipeline_mode<synchronous>, transform_indices = @transform_5, window_bounds = array<i64: 128, 128>}, {pipeline_mode = #tpu.pipeline_mode<synchronous>, transform_indices = @transform_6, window_bounds = array<i64: 1, 128>}, {transform_indices = @transform_7, window_bounds = array<i64: 8, 128>}]} {
    %c0 = arith.constant 0 : index
    %c0_0 = arith.constant 0 : index
    %0 = vector.load %arg1[%c0, %c0_0] : memref<8x8xf32, #tpu.memory_space<vmem>>, vector<8x8xf32>
    %1 = arith.truncf %0 : vector<8x8xf32> to vector<8x8xbf16>
    %c0_1 = arith.constant 0 : index
    %c0_2 = arith.constant 0 : index
    %2 = vector.load %arg2[%c0_1, %c0_2] : memref<8x128xbf16, #tpu.memory_space<vmem>>, vector<8x128xbf16>
    %cst = arith.constant dense<0.000000e+00> : vector<8x128xf32>
    %3 = tpu.matmul %1, %2, %cst {dimension_numbers = #tpu.dot_dimension_numbers<[1], [0], [0], [1], [0, 0, 1, 1], [], []>} : vector<8x8xbf16>, vector<8x128xbf16>, vector<8x128xf32> -> vector<8x128xf32>
    %c0_3 = arith.constant 0 : index
    %c0_4 = arith.constant 0 : index
    %4 = vector.load %arg3[%c0_3, %c0_4] : memref<1x128xf32, #tpu.memory_space<vmem>>, vector<1x128xf32>
    %5 = vector.broadcast %4 : vector<1x128xf32> to vector<8x128xf32>
    %6 = arith.addf %3, %5 : vector<8x128xf32>
    %cst_5 = arith.constant 0.000000e+00 : f32
    %7 = vector.broadcast %cst_5 : f32 to vector<8x128xf32>
    %8 = arith.maximumf %6, %7 : vector<8x128xf32>
    %9 = arith.truncf %8 : vector<8x128xf32> to vector<8x128xbf16>
    %c0_6 = arith.constant 0 : index
    %c0_7 = arith.constant 0 : index
    %10 = vector.load %arg4[%c0_6, %c0_7] : memref<128x128xbf16, #tpu.memory_space<vmem>>, vector<128x128xbf16>
    %cst_8 = arith.constant dense<0.000000e+00> : vector<8x128xf32>
    %11 = tpu.matmul %9, %10, %cst_8 {dimension_numbers = #tpu.dot_dimension_numbers<[1], [0], [0], [1], [0, 0, 1, 1], [], []>} : vector<8x128xbf16>, vector<128x128xbf16>, vector<8x128xf32> -> vector<8x128xf32>
    %c0_9 = arith.constant 0 : index
    %c0_10 = arith.constant 0 : index
    %12 = vector.load %arg5[%c0_9, %c0_10] : memref<1x128xf32, #tpu.memory_space<vmem>>, vector<1x128xf32>
    %13 = vector.broadcast %12 : vector<1x128xf32> to vector<8x128xf32>
    %14 = arith.addf %11, %13 : vector<8x128xf32>
    %cst_11 = arith.constant 0.000000e+00 : f32
    %15 = vector.broadcast %cst_11 : f32 to vector<8x128xf32>
    %16 = arith.maximumf %14, %15 : vector<8x128xf32>
    %17 = arith.truncf %16 : vector<8x128xf32> to vector<8x128xbf16>
    %c0_12 = arith.constant 0 : index
    %c0_13 = arith.constant 0 : index
    %18 = vector.load %arg6[%c0_12, %c0_13] : memref<128x128xbf16, #tpu.memory_space<vmem>>, vector<128x128xbf16>
    %cst_14 = arith.constant dense<0.000000e+00> : vector<8x128xf32>
    %19 = tpu.matmul %17, %18, %cst_14 {dimension_numbers = #tpu.dot_dimension_numbers<[1], [0], [0], [1], [0, 0, 1, 1], [], []>} : vector<8x128xbf16>, vector<128x128xbf16>, vector<8x128xf32> -> vector<8x128xf32>
    %c0_15 = arith.constant 0 : index
    %c0_16 = arith.constant 0 : index
    %20 = vector.load %arg7[%c0_15, %c0_16] : memref<1x128xf32, #tpu.memory_space<vmem>>, vector<1x128xf32>
    %21 = vector.broadcast %20 : vector<1x128xf32> to vector<8x128xf32>
    %22 = arith.addf %19, %21 : vector<8x128xf32>
    %c0_17 = arith.constant 0 : index
    %c0_18 = arith.constant 0 : index
    %23 = vector.load %arg8[%c0_17, %c0_18] : memref<8x128xf32, #tpu.memory_space<vmem>>, vector<8x128xf32>
    tpu.vector_store %arg8[%c0_17, %c0_18], %22 {strides = array<i32>} : memref<8x128xf32, #tpu.memory_space<vmem>>, vector<8x128xf32>,
    return
  }
  func.func @transform_0(%arg0: i32) -> (i32, i32) {
    %c0_i32 = arith.constant 0 : i32
    %c0_i32_0 = arith.constant 0 : i32
    return %arg0, %c0_i32 : i32, i32
  }
  func.func @transform_1(%arg0: i32) -> (i32, i32) {
    %c0_i32 = arith.constant 0 : i32
    %c0_i32_0 = arith.constant 0 : i32
    %c0_i32_1 = arith.constant 0 : i32
    return %c0_i32, %c0_i32_0 : i32, i32
  }
  func.func @transform_2(%arg0: i32) -> (i32, i32) {
    %c0_i32 = arith.constant 0 : i32
    %c0_i32_0 = arith.constant 0 : i32
    %c0_i32_1 = arith.constant 0 : i32
    return %c0_i32, %c0_i32_0 : i32, i32
  }
  func.func @transform_3(%arg0: i32) -> (i32, i32) {
    %c0_i32 = arith.constant 0 : i32
    %c0_i32_0 = arith.constant 0 : i32
    %c0_i32_1 = arith.constant 0 : i32
    return %c0_i32, %c0_i32_0 : i32, i32
  }
  func.func @transform_4(%arg0: i32) -> (i32, i32) {
    %c0_i32 = arith.constant 0 : i32
    %c0_i32_0 = arith.constant 0 : i32
    %c0_i32_1 = arith.constant 0 : i32
    return %c0_i32, %c0_i32_0 : i32, i32
  }
  func.func @transform_5(%arg0: i32) -> (i32, i32) {
    %c0_i32 = arith.constant 0 : i32
    %c0_i32_0 = arith.constant 0 : i32
    %c0_i32_1 = arith.constant 0 : i32
    return %c0_i32, %c0_i32_0 : i32, i32
  }
  func.func @transform_6(%arg0: i32) -> (i32, i32) {
    %c0_i32 = arith.constant 0 : i32
    %c0_i32_0 = arith.constant 0 : i32
    %c0_i32_1 = arith.constant 0 : i32
    return %c0_i32, %c0_i32_0 : i32, i32
  }
  func.func @transform_7(%arg0: i32) -> (i32, i32) {
    %c0_i32 = arith.constant 0 : i32
    %c0_i32_0 = arith.constant 0 : i32
    return %arg0, %c0_i32 : i32, i32
  }
}

</mosaic_0001>

<llo_original>
// kernel: qnetwork_forward.1
$region0: #{qnetwork_forward.1}
  #allocation0 [shape = 'u32[]', space=smem, size = 0x4, offset = 0x4, fixed_abs, tag = 'smem constant byte address 0x4 - core index']
  #allocation1 [shape = 'u32[72,128]{1,0:T(1,128)}', space=vmem, size = 0x9000, scoped, tag = 'internal scratch']
  %s0 = inlined_call_operand.vmem [shape: f32[8,8], index: 0, kind: input, shape index: {}]
  %s1 = inlined_call_operand.vmem [shape: bf16[8,128], index: 1, kind: input, shape index: {}]
  %s2 = inlined_call_operand.vmem [shape: f32[1,128], index: 2, kind: input, shape index: {}]
  %s3 = inlined_call_operand.hbm [shape: bf16[128,128], index: 3, kind: input, shape index: {}]
  %s4 = inlined_call_operand.vmem [shape: f32[1,128], index: 4, kind: input, shape index: {}]
  %s5 = inlined_call_operand.hbm [shape: bf16[128,128], index: 5, kind: input, shape index: {}]
  %s6 = inlined_call_operand.vmem [shape: f32[1,128], index: 6, kind: input, shape index: {}]
  %s7 = inlined_call_operand.vmem [shape: f32[8,128], index: 7, kind: output, shape index: {}]
  %s8 = sld [smem:[#allocation0]]
  $region46: #{qnetwork_forward.1} parent=0
    _
  %s10 = ssub.s32 1, %s8
  %s11 = scalar_select 0, %s10, %s8
  $region1: #{qnetwork_forward.1} parent=0
    #allocation2 [shape = 'u8[32768]{0}', space=vmem, size = 0x8000, scoped, tag = 'input window, operand 3, single buffered']
    #allocation3 [shape = 's32[1]{0}', space=sflag, size = 0x4, scoped, tag = 'scoped memory for qnetwork_forward.1']
    #allocation4 [shape = 'u8[32768]{0}', space=vmem, size = 0x8000, scoped, tag = 'input window, operand 5, single buffered']
    #allocation5 [shape = 's32[1]{0}', space=sflag, size = 0x4, scoped, tag = 'scoped memory for qnetwork_forward.1']
    %12 = vsyncpa [#allocation3], 0
    %13 = vsyncpa [#allocation5], 0
    // Predicated region
    $region2: #{qnetwork_forward.1} parent=1 // pred_check
      _
    $region3: #{qnetwork_forward.1} parent=1 // pred_check_branch
      %15 = sbr.rel (0) target = $region5
    $region4: #{qnetwork_forward.1} parent=1 // pred_region
      _
    $region5: #{qnetwork_forward.1} parent=1 // pred_fallthru
      _
    // Predicated region
    $region6: #{qnetwork_forward.1} parent=1 // pred_check
      _
    $region7: #{qnetwork_forward.1} parent=1 // pred_check_branch
      %17 = sbr.rel (0) target = $region9
    $region8: #{qnetwork_forward.1} parent=1 // pred_region
      _
    $region9: #{qnetwork_forward.1} parent=1 // pred_fallthru
      _
    // Predicated region
    $region10: #{qnetwork_forward.1} parent=1 // pred_check
      _
    $region11: #{qnetwork_forward.1} parent=1 // pred_check_branch
      %19 = sbr.rel (0) target = $region13
    $region12: #{qnetwork_forward.1} parent=1 // pred_region
      _
    $region13: #{qnetwork_forward.1} parent=1 // pred_fallthru
      _
    // Predicated region
    $region14: #{qnetwork_forward.1} parent=1 // pred_check
      _
    $region15: #{qnetwork_forward.1} parent=1 // pred_check_branch
      %21 = sbr.rel (0) target = $region17
    $region16: #{qnetwork_forward.1} parent=1 // pred_region
      %23 = vsyncadd [#allocation3], 0
      %s24 = sshll.u32 %s3, 4
      %s25 = int_to_ptr.hbm [resolvable:$true] %s24
      %s26 = sshll.u32 [#allocation2], 4
      %s27 = int_to_ptr.vmem [resolvable:$true] %s26
      %32 = dma.hbm_to_vmem [thread:$0]  %s25, 1024, %s27, [#allocation3], 64, 64, 4
    $region17: #{qnetwork_forward.1} parent=1 // pred_fallthru
      _
    // Predicated region
    $region18: #{qnetwork_forward.1} parent=1 // pred_check
      _
    $region19: #{qnetwork_forward.1} parent=1 // pred_check_branch
      %34 = sbr.rel (0) target = $region21
    $region20: #{qnetwork_forward.1} parent=1 // pred_region
      _
    $region21: #{qnetwork_forward.1} parent=1 // pred_fallthru
      _
    // Predicated region
    $region22: #{qnetwork_forward.1} parent=1 // pred_check
      _
    $region23: #{qnetwork_forward.1} parent=1 // pred_check_branch
      %36 = sbr.rel (0) target = $region25
    $region24: #{qnetwork_forward.1} parent=1 // pred_region
      %38 = vsyncadd [#allocation5], 0
      %s39 = sshll.u32 %s5, 4
      %s40 = int_to_ptr.hbm [resolvable:$true] %s39
      %s41 = sshll.u32 [#allocation4], 4
      %s42 = int_to_ptr.vmem [resolvable:$true] %s41
      %47 = dma.hbm_to_vmem [thread:$0]  %s40, 1024, %s42, [#allocation5], 64, 64, 4
    $region25: #{qnetwork_forward.1} parent=1 // pred_fallthru
      _
    // Predicated region
    $region26: #{qnetwork_forward.1} parent=1 // pred_check
      _
    $region27: #{qnetwork_forward.1} parent=1 // pred_check_branch
      %49 = sbr.rel (0) target = $region29
    $region28: #{qnetwork_forward.1} parent=1 // pred_region
      _
    $region29: #{qnetwork_forward.1} parent=1 // pred_fallthru
      _
    // Predicated region
    $region30: #{qnetwork_forward.1} parent=1 // pred_check
      _
    $region31: #{qnetwork_forward.1} parent=1 // pred_check_branch
      %51 = sbr.rel (0) target = $region33
    $region32: #{qnetwork_forward.1} parent=1 // pred_region
      %53 = dma.done [#allocation3], 1024
    $region33: #{qnetwork_forward.1} parent=1 // pred_fallthru
      _
    // Predicated region
    $region34: #{qnetwork_forward.1} parent=1 // pred_check
      _
    $region35: #{qnetwork_forward.1} parent=1 // pred_check_branch
      %55 = sbr.rel (0) target = $region37
    $region36: #{qnetwork_forward.1} parent=1 // pred_region
      %57 = dma.done [#allocation5], 1024
    $region37: #{qnetwork_forward.1} parent=1 // pred_fallthru
      _
    %v59 = vld [vmem:[%s0] sm:$0xff]
    %v60 = vpack.c.bf16 %v59, %v59
    %v61 = vld [vmem:[%s1] sm:$0xf]
    %v62 = vld [vmem:[%s2] sm:$0x1]
    %v64 = vperm.slane %v62, 0
    %vm66 = vcmask 64512
    %v68 = vsel %vm66, %v60, 0
    %vm70 = vcmask 1043456
    %v72 = vsel %vm70, %v61, 0
    %74 = vmatpush.bf16.msra.mxu0 0
    %75 = vmatpush.bf16.msra.mxu0 0
    %76 = vmatpush.bf16.msra.mxu0 0
    %77 = vmatpush.bf16.msra.mxu0 0
    %78 = vmatpush.bf16.msra.mxu0 0
    %79 = vmatpush.bf16.msra.mxu0 0
    %80 = vmatpush.bf16.msra.mxu0 0
    %81 = vmatpush.bf16.msra.mxu0 %v72
    %82 = vmatmul.bf16.gmra.mxu0 %v68
    %v83 = vpop.f32.mrf.mxu0
    %v84 = vadd.f32 %v64, %v83
    %v85 = vpop.f32.mrf.mxu0
    %86 = vdwg.mxu0
    %v87 = vmax.f32 %v84, 0.0
    %v88 = vpack.c.bf16 %v87, %v87
    %v89 = vld [vmem:[#allocation2] sm:$0xf]
    %v90 = vld [vmem:[#allocation2 + $0x4] sm:$0xf]
    %v91 = vld [vmem:[#allocation2 + $0x8] sm:$0xf]
    %v92 = vld [vmem:[#allocation2 + $0xc] sm:$0xf]
    %v93 = vld [vmem:[#allocation2 + $0x10] sm:$0xf]
    %v94 = vld [vmem:[#allocation2 + $0x14] sm:$0xf]
    %v95 = vld [vmem:[#allocation2 + $0x18] sm:$0xf]
    %v96 = vld [vmem:[#allocation2 + $0x1c] sm:$0xf]
    %v97 = vld [vmem:[#allocation2 + $0x20] sm:$0xf]
    %v98 = vld [vmem:[#allocation2 + $0x24] sm:$0xf]
    %v99 = vld [vmem:[#allocation2 + $0x28] sm:$0xf]
    %v100 = vld [vmem:[#allocation2 + $0x2c] sm:$0xf]
    %v101 = vld [vmem:[#allocation2 + $0x30] sm:$0xf]
    %v102 = vld [vmem:[#allocation2 + $0x34] sm:$0xf]
    %v103 = vld [vmem:[#allocation2 + $0x38] sm:$0xf]
    %v104 = vld [vmem:[#allocation2 + $0x3c] sm:$0xf]
    %v105 = vld [vmem:[%s4] sm:$0x1]
    %v107 = vperm.slane %v105, 0
    %v125 = vunpack.c.l.b16 %v89
    %v126 = vunpack.c.l.b16 %v90
    %v127 = vunpack.c.l.b16 %v91
    %v128 = vunpack.c.l.b16 %v92
    %v129 = vunpack.c.l.b16 %v93
    %v130 = vunpack.c.l.b16 %v94
    %v131 = vunpack.c.l.b16 %v95
    %v132 = vunpack.c.l.b16 %v96
    %v133 = vunpack.c.l.b16 %v97
    %v134 = vunpack.c.l.b16 %v98
    %v135 = vunpack.c.l.b16 %v99
    %v136 = vunpack.c.l.b16 %v100
    %v137 = vunpack.c.l.b16 %v101
    %v138 = vunpack.c.l.b16 %v102
    %v139 = vunpack.c.l.b16 %v103
    %v140 = vunpack.c.l.b16 %v104
    %v141 = vpack.c.b16 %v126, %v125
    %v142 = vpack.c.b16 %v128, %v127
    %v143 = vpack.c.b16 %v130, %v129
    %v144 = vpack.c.b16 %v132, %v131
    %v145 = vpack.c.b16 %v134, %v133
    %v146 = vpack.c.b16 %v136, %v135
    %v147 = vpack.c.b16 %v138, %v137
    %v148 = vpack.c.b16 %v140, %v139
    %157 = vmatpush.bf16.msra.mxu0 %v148
    %158 = vmatpush.bf16.msra.mxu0 %v147
    %159 = vmatpush.bf16.msra.mxu0 %v146
    %160 = vmatpush.bf16.msra.mxu0 %v145
    %161 = vmatpush.bf16.msra.mxu0 %v144
    %162 = vmatpush.bf16.msra.mxu0 %v143
    %163 = vmatpush.bf16.msra.mxu0 %v142
    %164 = vmatpush.bf16.msra.mxu0 %v141
    %165 = vmatmul.bf16.gmra.mxu0 %v88
    %v166 = vpop.f32.mrf.mxu0
    %v167 = vadd.f32 %v107, %v166
    %v168 = vpop.f32.mrf.mxu0
    %169 = vdwg.mxu0
    %v170 = vmax.f32 %v167, 0.0
    %v171 = vpack.c.bf16 %v170, %v170
    %v172 = vld [vmem:[#allocation4] sm:$0xf]
    %v173 = vld [vmem:[#allocation4 + $0x4] sm:$0xf]
    %v174 = vld [vmem:[#allocation4 + $0x8] sm:$0xf]
    %v175 = vld [vmem:[#allocation4 + $0xc] sm:$0xf]
    %v176 = vld [vmem:[#allocation4 + $0x10] sm:$0xf]
    %v177 = vld [vmem:[#allocation4 + $0x14] sm:$0xf]
    %v178 = vld [vmem:[#allocation4 + $0x18] sm:$0xf]
    %v179 = vld [vmem:[#allocation4 + $0x1c] sm:$0xf]
    %v180 = vld [vmem:[#allocation4 + $0x20] sm:$0xf]
    %v181 = vld [vmem:[#allocation4 + $0x24] sm:$0xf]
    %v182 = vld [vmem:[#allocation4 + $0x28] sm:$0xf]
    %v183 = vld [vmem:[#allocation4 + $0x2c] sm:$0xf]
    %v184 = vld [vmem:[#allocation4 + $0x30] sm:$0xf]
    %v185 = vld [vmem:[#allocation4 + $0x34] sm:$0xf]
    %v186 = vld [vmem:[#allocation4 + $0x38] sm:$0xf]
    %v187 = vld [vmem:[#allocation4 + $0x3c] sm:$0xf]
    %v188 = vld [vmem:[%s6] sm:$0x1]
    %v190 = vperm.slane %v188, 0
    %v208 = vunpack.c.l.b16 %v172
    %v209 = vunpack.c.l.b16 %v173
    %v210 = vunpack.c.l.b16 %v174
    %v211 = vunpack.c.l.b16 %v175
    %v212 = vunpack.c.l.b16 %v176
    %v213 = vunpack.c.l.b16 %v177
    %v214 = vunpack.c.l.b16 %v178
    %v215 = vunpack.c.l.b16 %v179
    %v216 = vunpack.c.l.b16 %v180
    %v217 = vunpack.c.l.b16 %v181
    %v218 = vunpack.c.l.b16 %v182
    %v219 = vunpack.c.l.b16 %v183
    %v220 = vunpack.c.l.b16 %v184
    %v221 = vunpack.c.l.b16 %v185
    %v222 = vunpack.c.l.b16 %v186
    %v223 = vunpack.c.l.b16 %v187
    %v224 = vpack.c.b16 %v209, %v208
    %v225 = vpack.c.b16 %v211, %v210
    %v226 = vpack.c.b16 %v213, %v212
    %v227 = vpack.c.b16 %v215, %v214
    %v228 = vpack.c.b16 %v217, %v216
    %v229 = vpack.c.b16 %v219, %v218
    %v230 = vpack.c.b16 %v221, %v220
    %v231 = vpack.c.b16 %v223, %v222
    %240 = vmatpush.bf16.msra.mxu0 %v231
    %241 = vmatpush.bf16.msra.mxu0 %v230
    %242 = vmatpush.bf16.msra.mxu0 %v229
    %243 = vmatpush.bf16.msra.mxu0 %v228
    %244 = vmatpush.bf16.msra.mxu0 %v227
    %245 = vmatpush.bf16.msra.mxu0 %v226
    %246 = vmatpush.bf16.msra.mxu0 %v225
    %247 = vmatpush.bf16.msra.mxu0 %v224
    %248 = vmatmul.bf16.gmra.mxu0 %v171
    %v249 = vpop.f32.mrf.mxu0
    %v250 = vadd.f32 %v190, %v249
    %v251 = vpop.f32.mrf.mxu0
    %252 = vdwg.mxu0
    %253 = vst [vmem:[%s7] sm:$0xff] %v250
    // Predicated region
    $region38: #{qnetwork_forward.1} parent=1 // pred_check
      _
    $region39: #{qnetwork_forward.1} parent=1 // pred_check_branch
      %255 = sbr.rel (0) target = $region41
    $region40: #{qnetwork_forward.1} parent=1 // pred_region
      _
    $region41: #{qnetwork_forward.1} parent=1 // pred_fallthru
      _
    // Predicated region
    $region42: #{qnetwork_forward.1} parent=1 // pred_check
      _
    $region43: #{qnetwork_forward.1} parent=1 // pred_check_branch
      %257 = sbr.rel (0) target = $region45
    $region44: #{qnetwork_forward.1} parent=1 // pred_region
      _
    $region45: #{qnetwork_forward.1} parent=1 // pred_fallthru
      _
    %258 = vsyncpa [#allocation3], 1
    %259 = vsyncpa [#allocation5], 1

</llo_original>
